<compile_context>
chip_gen: v7x
topology: tpu7x:2x2x1
jax: 0.10.0
libtpu: 0.0.40
codegen_flags: <defaults>
</compile_context>

<pallas_src>
import functools

import jax
import jax.numpy as jnp
from jax.experimental import pallas as pl
from jax.experimental.pallas import tpu as pltpu


def rnn_scan_kernel(pre_ref, whh_ref, h_out_ref, h_scratch, *, unroll):
    """Recurrent core: T timesteps per grid step.

    pre_ref:   (T, Bt, Hp) bf16  pre-activations  x_t @ W_ih^T + (b_ih + b_hh)
    whh_ref:   (Hp, Hp)    bf16  W_hh^T (lane/sublane padded with zeros)
    h_out_ref: (T, Bt, Hp) bf16  hidden states h_t
    h_scratch: (Bt, Hp)    f32   carried hidden state, persists across time chunks
    """
    t_chunk = pl.program_id(1)

    # Re-initialize the carried state at the start of every batch chunk's time sweep.
    @pl.when(t_chunk == 0)
    def _():
        h_scratch[...] = jnp.zeros_like(h_scratch)

    w = whh_ref[...]                       # loaded once per grid step (bf16)
    T = pre_ref.shape[0]

    def step(i, h):
        # bf16 MXU inputs, f32 accumulation; add/tanh stay f32.
        acc = jnp.dot(h.astype(w.dtype), w, preferred_element_type=jnp.float32)
        h_new = jnp.tanh(pre_ref[i].astype(jnp.float32) + acc)
        h_out_ref[i] = h_new.astype(h_out_ref.dtype)   # lane-dense (Bt, Hp) store
        return h_new

    h_final = jax.lax.fori_loop(0, T, step, h_scratch[...], unroll=unroll)
    h_scratch[...] = h_final


def _round_up(x, m):
    return (x + m - 1) // m * m


def _vmem_budget_bytes():
    """Generation-aware budget for the streamed (double-buffered) blocks."""
    try:
        cap = pltpu.get_tpu_info().vmem_capacity_bytes
    except Exception:
        cap = 64 << 20                     # conservative fallback (v7x physical)
    # Keep streamed data well under physical VMEM: 16 MiB on v7x (64 MiB),
    # 24 MiB on v5e/v6e (128 MiB).
    return int(min(cap // 4, 24 << 20))


def _choose_batch_chunk(Bp):
    """Bt: multiple of 8 dividing Bp; prefer >=2 chunks (v7x megacore), <=128 rows."""
    if Bp < 16:
        return Bp
    best = 8
    for cand in range(8, min(Bp // 2, 128) + 1, 8):
        if Bp % cand == 0:
            best = cand
    return best


def _choose_time_chunk(S, Bt, Hp, budget_bytes):
    """Largest T whose double-buffered bf16 in/out blocks fit the budget.

    Budget model: 2x (T,Bt,Hp) bf16 in + 2x (T,Bt,Hp) bf16 out = 8*T*Bt*Hp bytes,
    minus the resident W_hh^T double buffer and the f32 hidden-state scratch.
    """
    per_t = 8 * Bt * Hp
    overhead = 2 * (Hp * Hp * 2) + Bt * Hp * 4
    avail = max(budget_bytes - overhead, per_t)
    return max(1, min(S, avail // per_t))


@functools.partial(jax.jit, static_argnames=("time_chunk",))
def rnn_model_forward(x, w_ih, w_hh, b_ih, b_hh, w_fc, b_fc, *, time_chunk=None):
    """x: (B, S, In) batch-first, like PyTorch. Returns (B, S, Out)."""
    B, S, In = x.shape
    H = w_ih.shape[0]
    Out = w_fc.shape[0]

    # --- Padded, hardware-friendly sizes: lane dim multiple of 128, batch mult of 8.
    Hp = _round_up(H, 128)
    Bp = _round_up(B, 8)

    # --- Hoisted input projection: one MXU-efficient GEMM over all B*S rows.
    # bf16 inputs, f32 accumulation; output laid out time-major (S, B, H) directly,
    # both RNN biases pre-summed and folded in.
    pre = jnp.einsum("bsi,hi->sbh",
                     x.astype(jnp.bfloat16), w_ih.astype(jnp.bfloat16),
                     preferred_element_type=jnp.float32)
    pre = pre + (b_ih + b_hh).astype(jnp.float32)                 # (S, B, H) f32

    # Zero-pad batch and hidden dims AFTER the bias add so padded rows/lanes are
    # exactly 0 (padded hidden lanes then stay 0 through the whole recurrence).
    pre = jnp.pad(pre, ((0, 0), (0, Bp - B), (0, Hp - H)))
    pre = pre.astype(jnp.bfloat16)                                # bf16 in HBM

    whh_t = jnp.pad(w_hh.T, ((0, Hp - H), (0, Hp - H))).astype(jnp.bfloat16)

    # --- Tiling: batch chunks (parallel / megacore) x time chunks (sequential).
    Bt = _choose_batch_chunk(Bp)
    nb = Bp // Bt
    assert Bp % Bt == 0 and Bt % 8 == 0 and Hp % 128 == 0

    budget = _vmem_budget_bytes()
    T = time_chunk if time_chunk is not None else _choose_time_chunk(S, Bt, Hp, budget)
    S_pad = _round_up(S, T)                 # avoid T=1 collapse for awkward S
    if S_pad != S:
        pre = jnp.pad(pre, ((0, S_pad - S), (0, 0), (0, 0)))
    nt = S_pad // T
    assert S_pad % T == 0

    # Cap unrolling so live vregs stay bounded as Bt grows.
    if Bt * Hp <= 16 * 128:
        unroll = min(T, 8)
    elif Bt * Hp <= 64 * 128:
        unroll = min(T, 4)
    else:
        unroll = min(T, 2)
    unroll = max(unroll, 1)

    vmem_limit = budget + (8 << 20)         # headroom over the streamed-data budget

    hs = pl.pallas_call(
        functools.partial(rnn_scan_kernel, unroll=unroll),
        out_shape=jax.ShapeDtypeStruct((S_pad, Bp, Hp), jnp.bfloat16),
        grid_spec=pltpu.PrefetchScalarGridSpec(
            num_scalar_prefetch=0,
            # Time MUST be the innermost grid axis (and "arbitrary") for the
            # carried h_scratch + t_chunk==0 re-init invariant to hold.
            grid=(nb, nt),
            in_specs=[
                pl.BlockSpec((T, Bt, Hp), lambda b, t: (t, b, 0)),   # pre-activations
                pl.BlockSpec((Hp, Hp), lambda b, t: (0, 0)),         # W_hh^T (resident)
            ],
            out_specs=pl.BlockSpec((T, Bt, Hp), lambda b, t: (t, b, 0)),
            scratch_shapes=[pltpu.VMEM((Bt, Hp), jnp.float32)],      # carried hidden state
        ),
        compiler_params=pltpu.CompilerParams(
            dimension_semantics=("parallel", "arbitrary"),
            vmem_limit_bytes=vmem_limit,
        ),
    )(pre, whh_t)                                                    # (S_pad, Bp, Hp) bf16

    # --- Hoisted FC head: one dense GEMM. W_fc is zero-padded on the hidden dim so
    # the contraction stays lane-dense; padded hidden lanes of hs are exactly zero.
    w_fc_p = jnp.pad(w_fc, ((0, 0), (0, Hp - H))).astype(jnp.bfloat16)
    out = jnp.einsum("sbh,oh->bso", hs, w_fc_p,
                     preferred_element_type=jnp.float32)             # (Bp, S_pad, Out)
    out = out[:B, :S] + b_fc
    return out.astype(x.dtype)                                       # (B, S, Out)


def reference_forward(x, w_ih, w_hh, b_ih, b_hh, w_fc, b_fc):
    """Pure-JAX f32 reference matching torch.nn.RNN + Linear semantics."""
    B, S, In = x.shape
    H = w_ih.shape[0]

    def step(h, x_t):
        h_new = jnp.tanh(x_t @ w_ih.T + b_ih + h @ w_hh.T + b_hh)
        return h_new, h_new

    h0 = jnp.zeros((B, H), jnp.float32)
    _, hs = jax.lax.scan(step, h0, jnp.transpose(x, (1, 0, 2)))   # (S, B, H)
    hs = jnp.transpose(hs, (1, 0, 2))                             # (B, S, H)
    return hs @ w_fc.T + b_fc


if __name__ == "__main__":
    # Small shapes consistent with the module's forward (batch-first (B, S, In)).
    B, S = 2, 8
    input_size = 64          # original script used 10000; scaled down
    hidden_size = 32         # original 128 (padded to 128 lanes inside the wrapper)
    output_size = 6          # len(signal_types)

    key = jax.random.PRNGKey(0)
    kx, k1, k2, k3, k4, k5, k6 = jax.random.split(key, 7)

    # Deterministic param init, matching PyTorch's U(-1/sqrt(H), 1/sqrt(H)) scheme.
    bound = 1.0 / jnp.sqrt(jnp.float32(hidden_size))
    u = lambda k, shape: jax.random.uniform(k, shape, jnp.float32, -bound, bound)

    w_ih = u(k1, (hidden_size, input_size))   # rnn.weight_ih_l0
    w_hh = u(k2, (hidden_size, hidden_size))  # rnn.weight_hh_l0
    b_ih = u(k3, (hidden_size,))              # rnn.bias_ih_l0
    b_hh = u(k4, (hidden_size,))              # rnn.bias_hh_l0
    w_fc = u(k5, (output_size, hidden_size))  # fc.weight
    b_fc = u(k6, (output_size,))              # fc.bias

    x = jax.random.normal(kx, (B, S, input_size), jnp.float32)

    out = rnn_model_forward(x, w_ih, w_hh, b_ih, b_hh, w_fc, b_fc)
    out = jax.block_until_ready(out)

    ref = reference_forward(x, w_ih, w_hh, b_ih, b_hh, w_fc, b_fc)
    assert out.shape == (B, S, output_size), out.shape
    # bf16 MXU inputs (per perf review) -> relaxed tolerance vs the f32 reference.
    max_err = float(jnp.max(jnp.abs(out - ref)))
    assert jnp.allclose(out, ref, atol=2e-2, rtol=2e-2), max_err

    print("KERNEL_OK")
</pallas_src>

<mosaic_0001>
module attributes {stable_mosaic.version = 11 : i64} {
  func.func @rnn_scan_kernel(%arg0: i32, %arg1: i32, %arg2: memref<8x8x128xbf16, #tpu.memory_space<vmem>>, %arg3: memref<128x128xbf16, #tpu.memory_space<vmem>>, %arg4: memref<8x8x128xbf16, #tpu.memory_space<vmem>>, %arg5: memref<8x128xf32, #tpu.memory_space<vmem>>) attributes {dimension_semantics = [#tpu.dimension_semantics<parallel>, #tpu.dimension_semantics<arbitrary>], iteration_bounds = array<i64: 1, 1>, scalar_prefetch = 0 : i64, scratch_operands = 1 : i64, tpu.core_type = #tpu.core_type<tc>, window_params = [{transform_indices = @transform_0, window_bounds = array<i64: 8, 8, 128>}, {pipeline_mode = #tpu.pipeline_mode<synchronous>, transform_indices = @transform_1, window_bounds = array<i64: 128, 128>}, {transform_indices = @transform_2, window_bounds = array<i64: 8, 8, 128>}]} {
    %c0_i32 = arith.constant 0 : i32
    %0 = arith.cmpi eq, %arg1, %c0_i32 : i32
    %1 = arith.extui %0 : i1 to i32
    %c0_i32_0 = arith.constant 0 : i32
    %2 = arith.cmpi ne, %1, %c0_i32_0 : i32
    scf.if %2 {
      %cst_46 = arith.constant 0.000000e+00 : f32
      %110 = vector.broadcast %cst_46 : f32 to vector<8x128xf32>
      %c0_47 = arith.constant 0 : index
      %c0_48 = arith.constant 0 : index
      %111 = vector.load %arg5[%c0_47, %c0_48] : memref<8x128xf32, #tpu.memory_space<vmem>>, vector<8x128xf32>
      tpu.vector_store %arg5[%c0_47, %c0_48], %110 {strides = array<i32>} : memref<8x128xf32, #tpu.memory_space<vmem>>, vector<8x128xf32>,
    } else {
    }
    %c0 = arith.constant 0 : index
    %c0_1 = arith.constant 0 : index
    %3 = vector.load %arg3[%c0, %c0_1] : memref<128x128xbf16, #tpu.memory_space<vmem>>, vector<128x128xbf16>
    %c0_2 = arith.constant 0 : index
    %c0_3 = arith.constant 0 : index
    %4 = vector.load %arg5[%c0_2, %c0_3] : memref<8x128xf32, #tpu.memory_space<vmem>>, vector<8x128xf32>
    %c0_i32_4 = arith.constant 0 : i32
    %5 = arith.truncf %4 : vector<8x128xf32> to vector<8x128xbf16>
    %cst = arith.constant dense<0.000000e+00> : vector<8x128xf32>
    %6 = tpu.matmul %5, %3, %cst {dimension_numbers = #tpu.dot_dimension_numbers<[1], [0], [0], [1], [0, 0, 1, 1], [], []>} : vector<8x128xbf16>, vector<128x128xbf16>, vector<8x128xf32> -> vector<8x128xf32>
    %7 = arith.index_cast %c0_i32_4 : i32 to index
    %c0_5 = arith.constant 0 : index
    %c0_6 = arith.constant 0 : index
    %8 = vector.load %arg2[%7, %c0_5, %c0_6] : memref<8x8x128xbf16, #tpu.memory_space<vmem>>, vector<1x8x128xbf16>
    %9 = vector.shape_cast %8 : vector<1x8x128xbf16> to vector<8x128xbf16>
    %10 = arith.extf %9 : vector<8x128xbf16> to vector<8x128xf32>
    %11 = arith.addf %10, %6 : vector<8x128xf32>
    %12 = math.tanh %11 : vector<8x128xf32>
    %13 = arith.truncf %12 : vector<8x128xf32> to vector<8x128xbf16>
    %14 = arith.index_cast %c0_i32_4 : i32 to index
    %c0_7 = arith.constant 0 : index
    %c0_8 = arith.constant 0 : index
    %15 = vector.load %arg4[%14, %c0_7, %c0_8] : memref<8x8x128xbf16, #tpu.memory_space<vmem>>, vector<1x8x128xbf16>
    %16 = vector.shape_cast %15 : vector<1x8x128xbf16> to vector<8x128xbf16>
    %17 = vector.shape_cast %13 : vector<8x128xbf16> to vector<1x8x128xbf16>
    tpu.vector_store %arg4[%14, %c0_7, %c0_8], %17 {strides = array<i32>} : memref<8x8x128xbf16, #tpu.memory_space<vmem>>, vector<1x8x128xbf16>,
    %c1_i32 = arith.constant 1 : i32
    %18 = arith.truncf %12 : vector<8x128xf32> to vector<8x128xbf16>
    %cst_9 = arith.constant dense<0.000000e+00> : vector<8x128xf32>
    %19 = tpu.matmul %18, %3, %cst_9 {dimension_numbers = #tpu.dot_dimension_numbers<[1], [0], [0], [1], [0, 0, 1, 1], [], []>} : vector<8x128xbf16>, vector<128x128xbf16>, vector<8x128xf32> -> vector<8x128xf32>
    %20 = arith.index_cast %c1_i32 : i32 to index
    %c0_10 = arith.constant 0 : index
    %c0_11 = arith.constant 0 : index
    %21 = vector.load %arg2[%20, %c0_10, %c0_11] : memref<8x8x128xbf16, #tpu.memory_space<vmem>>, vector<1x8x128xbf16>
    %22 = vector.shape_cast %21 : vector<1x8x128xbf16> to vector<8x128xbf16>
    %23 = arith.extf %22 : vector<8x128xbf16> to vector<8x128xf32>
    %24 = arith.addf %23, %19 : vector<8x128xf32>
    %25 = math.tanh %24 : vector<8x128xf32>
    %26 = arith.truncf %25 : vector<8x128xf32> to vector<8x128xbf16>
    %27 = arith.index_cast %c1_i32 : i32 to index
    %c0_12 = arith.constant 0 : index
    %c0_13 = arith.constant 0 : index
    %28 = vector.load %arg4[%27, %c0_12, %c0_13] : memref<8x8x128xbf16, #tpu.memory_space<vmem>>, vector<1x8x128xbf16>
    %29 = vector.shape_cast %28 : vector<1x8x128xbf16> to vector<8x128xbf16>
    %30 = vector.shape_cast %26 : vector<8x128xbf16> to vector<1x8x128xbf16>
    tpu.vector_store %arg4[%27, %c0_12, %c0_13], %30 {strides = array<i32>} : memref<8x8x128xbf16, #tpu.memory_space<vmem>>, vector<1x8x128xbf16>,
    %c2_i32 = arith.constant 2 : i32
    %31 = arith.truncf %25 : vector<8x128xf32> to vector<8x128xbf16>
    %cst_14 = arith.constant dense<0.000000e+00> : vector<8x128xf32>
    %32 = tpu.matmul %31, %3, %cst_14 {dimension_numbers = #tpu.dot_dimension_numbers<[1], [0], [0], [1], [0, 0, 1, 1], [], []>} : vector<8x128xbf16>, vector<128x128xbf16>, vector<8x128xf32> -> vector<8x128xf32>
    %33 = arith.index_cast %c2_i32 : i32 to index
    %c0_15 = arith.constant 0 : index
    %c0_16 = arith.constant 0 : index
    %34 = vector.load %arg2[%33, %c0_15, %c0_16] : memref<8x8x128xbf16, #tpu.memory_space<vmem>>, vector<1x8x128xbf16>
    %35 = vector.shape_cast %34 : vector<1x8x128xbf16> to vector<8x128xbf16>
    %36 = arith.extf %35 : vector<8x128xbf16> to vector<8x128xf32>
    %37 = arith.addf %36, %32 : vector<8x128xf32>
    %38 = math.tanh %37 : vector<8x128xf32>
    %39 = arith.truncf %38 : vector<8x128xf32> to vector<8x128xbf16>
    %40 = arith.index_cast %c2_i32 : i32 to index
    %c0_17 = arith.constant 0 : index
    %c0_18 = arith.constant 0 : index
    %41 = vector.load %arg4[%40, %c0_17, %c0_18] : memref<8x8x128xbf16, #tpu.memory_space<vmem>>, vector<1x8x128xbf16>
    %42 = vector.shape_cast %41 : vector<1x8x128xbf16> to vector<8x128xbf16>
    %43 = vector.shape_cast %39 : vector<8x128xbf16> to vector<1x8x128xbf16>
    tpu.vector_store %arg4[%40, %c0_17, %c0_18], %43 {strides = array<i32>} : memref<8x8x128xbf16, #tpu.memory_space<vmem>>, vector<1x8x128xbf16>,
    %c3_i32 = arith.constant 3 : i32
    %44 = arith.truncf %38 : vector<8x128xf32> to vector<8x128xbf16>
    %cst_19 = arith.constant dense<0.000000e+00> : vector<8x128xf32>
    %45 = tpu.matmul %44, %3, %cst_19 {dimension_numbers = #tpu.dot_dimension_numbers<[1], [0], [0], [1], [0, 0, 1, 1], [], []>} : vector<8x128xbf16>, vector<128x128xbf16>, vector<8x128xf32> -> vector<8x128xf32>
    %46 = arith.index_cast %c3_i32 : i32 to index
    %c0_20 = arith.constant 0 : index
    %c0_21 = arith.constant 0 : index
    %47 = vector.load %arg2[%46, %c0_20, %c0_21] : memref<8x8x128xbf16, #tpu.memory_space<vmem>>, vector<1x8x128xbf16>
    %48 = vector.shape_cast %47 : vector<1x8x128xbf16> to vector<8x128xbf16>
    %49 = arith.extf %48 : vector<8x128xbf16> to vector<8x128xf32>
    %50 = arith.addf %49, %45 : vector<8x128xf32>
    %51 = math.tanh %50 : vector<8x128xf32>
    %52 = arith.truncf %51 : vector<8x128xf32> to vector<8x128xbf16>
    %53 = arith.index_cast %c3_i32 : i32 to index
    %c0_22 = arith.constant 0 : index
    %c0_23 = arith.constant 0 : index
    %54 = vector.load %arg4[%53, %c0_22, %c0_23] : memref<8x8x128xbf16, #tpu.memory_space<vmem>>, vector<1x8x128xbf16>
    %55 = vector.shape_cast %54 : vector<1x8x128xbf16> to vector<8x128xbf16>
    %56 = vector.shape_cast %52 : vector<8x128xbf16> to vector<1x8x128xbf16>
    tpu.vector_store %arg4[%53, %c0_22, %c0_23], %56 {strides = array<i32>} : memref<8x8x128xbf16, #tpu.memory_space<vmem>>, vector<1x8x128xbf16>,
    %c4_i32 = arith.constant 4 : i32
    %57 = arith.truncf %51 : vector<8x128xf32> to vector<8x128xbf16>
    %cst_24 = arith.constant dense<0.000000e+00> : vector<8x128xf32>
    %58 = tpu.matmul %57, %3, %cst_24 {dimension_numbers = #tpu.dot_dimension_numbers<[1], [0], [0], [1], [0, 0, 1, 1], [], []>} : vector<8x128xbf16>, vector<128x128xbf16>, vector<8x128xf32> -> vector<8x128xf32>
    %59 = arith.index_cast %c4_i32 : i32 to index
    %c0_25 = arith.constant 0 : index
    %c0_26 = arith.constant 0 : index
    %60 = vector.load %arg2[%59, %c0_25, %c0_26] : memref<8x8x128xbf16, #tpu.memory_space<vmem>>, vector<1x8x128xbf16>
    %61 = vector.shape_cast %60 : vector<1x8x128xbf16> to vector<8x128xbf16>
    %62 = arith.extf %61 : vector<8x128xbf16> to vector<8x128xf32>
    %63 = arith.addf %62, %58 : vector<8x128xf32>
    %64 = math.tanh %63 : vector<8x128xf32>
    %65 = arith.truncf %64 : vector<8x128xf32> to vector<8x128xbf16>
    %66 = arith.index_cast %c4_i32 : i32 to index
    %c0_27 = arith.constant 0 : index
    %c0_28 = arith.constant 0 : index
    %67 = vector.load %arg4[%66, %c0_27, %c0_28] : memref<8x8x128xbf16, #tpu.memory_space<vmem>>, vector<1x8x128xbf16>
    %68 = vector.shape_cast %67 : vector<1x8x128xbf16> to vector<8x128xbf16>
    %69 = vector.shape_cast %65 : vector<8x128xbf16> to vector<1x8x128xbf16>
    tpu.vector_store %arg4[%66, %c0_27, %c0_28], %69 {strides = array<i32>} : memref<8x8x128xbf16, #tpu.memory_space<vmem>>, vector<1x8x128xbf16>,
    %c5_i32 = arith.constant 5 : i32
    %70 = arith.truncf %64 : vector<8x128xf32> to vector<8x128xbf16>
    %cst_29 = arith.constant dense<0.000000e+00> : vector<8x128xf32>
    %71 = tpu.matmul %70, %3, %cst_29 {dimension_numbers = #tpu.dot_dimension_numbers<[1], [0], [0], [1], [0, 0, 1, 1], [], []>} : vector<8x128xbf16>, vector<128x128xbf16>, vector<8x128xf32> -> vector<8x128xf32>
    %72 = arith.index_cast %c5_i32 : i32 to index
    %c0_30 = arith.constant 0 : index
    %c0_31 = arith.constant 0 : index
    %73 = vector.load %arg2[%72, %c0_30, %c0_31] : memref<8x8x128xbf16, #tpu.memory_space<vmem>>, vector<1x8x128xbf16>
    %74 = vector.shape_cast %73 : vector<1x8x128xbf16> to vector<8x128xbf16>
    %75 = arith.extf %74 : vector<8x128xbf16> to vector<8x128xf32>
    %76 = arith.addf %75, %71 : vector<8x128xf32>
    %77 = math.tanh %76 : vector<8x128xf32>
    %78 = arith.truncf %77 : vector<8x128xf32> to vector<8x128xbf16>
    %79 = arith.index_cast %c5_i32 : i32 to index
    %c0_32 = arith.constant 0 : index
    %c0_33 = arith.constant 0 : index
    %80 = vector.load %arg4[%79, %c0_32, %c0_33] : memref<8x8x128xbf16, #tpu.memory_space<vmem>>, vector<1x8x128xbf16>
    %81 = vector.shape_cast %80 : vector<1x8x128xbf16> to vector<8x128xbf16>
    %82 = vector.shape_cast %78 : vector<8x128xbf16> to vector<1x8x128xbf16>
    tpu.vector_store %arg4[%79, %c0_32, %c0_33], %82 {strides = array<i32>} : memref<8x8x128xbf16, #tpu.memory_space<vmem>>, vector<1x8x128xbf16>,
    %c6_i32 = arith.constant 6 : i32
    %83 = arith.truncf %77 : vector<8x128xf32> to vector<8x128xbf16>
    %cst_34 = arith.constant dense<0.000000e+00> : vector<8x128xf32>
    %84 = tpu.matmul %83, %3, %cst_34 {dimension_numbers = #tpu.dot_dimension_numbers<[1], [0], [0], [1], [0, 0, 1, 1], [], []>} : vector<8x128xbf16>, vector<128x128xbf16>, vector<8x128xf32> -> vector<8x128xf32>
    %85 = arith.index_cast %c6_i32 : i32 to index
    %c0_35 = arith.constant 0 : index
    %c0_36 = arith.constant 0 : index
    %86 = vector.load %arg2[%85, %c0_35, %c0_36] : memref<8x8x128xbf16, #tpu.memory_space<vmem>>, vector<1x8x128xbf16>
    %87 = vector.shape_cast %86 : vector<1x8x128xbf16> to vector<8x128xbf16>
    %88 = arith.extf %87 : vector<8x128xbf16> to vector<8x128xf32>
    %89 = arith.addf %88, %84 : vector<8x128xf32>
    %90 = math.tanh %89 : vector<8x128xf32>
    %91 = arith.truncf %90 : vector<8x128xf32> to vector<8x128xbf16>
    %92 = arith.index_cast %c6_i32 : i32 to index
    %c0_37 = arith.constant 0 : index
    %c0_38 = arith.constant 0 : index
    %93 = vector.load %arg4[%92, %c0_37, %c0_38] : memref<8x8x128xbf16, #tpu.memory_space<vmem>>, vector<1x8x128xbf16>
    %94 = vector.shape_cast %93 : vector<1x8x128xbf16> to vector<8x128xbf16>
    %95 = vector.shape_cast %91 : vector<8x128xbf16> to vector<1x8x128xbf16>
    tpu.vector_store %arg4[%92, %c0_37, %c0_38], %95 {strides = array<i32>} : memref<8x8x128xbf16, #tpu.memory_space<vmem>>, vector<1x8x128xbf16>,
    %c7_i32 = arith.constant 7 : i32
    %96 = arith.truncf %90 : vector<8x128xf32> to vector<8x128xbf16>
    %cst_39 = arith.constant dense<0.000000e+00> : vector<8x128xf32>
    %97 = tpu.matmul %96, %3, %cst_39 {dimension_numbers = #tpu.dot_dimension_numbers<[1], [0], [0], [1], [0, 0, 1, 1], [], []>} : vector<8x128xbf16>, vector<128x128xbf16>, vector<8x128xf32> -> vector<8x128xf32>
    %98 = arith.index_cast %c7_i32 : i32 to index
    %c0_40 = arith.constant 0 : index
    %c0_41 = arith.constant 0 : index
    %99 = vector.load %arg2[%98, %c0_40, %c0_41] : memref<8x8x128xbf16, #tpu.memory_space<vmem>>, vector<1x8x128xbf16>
    %100 = vector.shape_cast %99 : vector<1x8x128xbf16> to vector<8x128xbf16>
    %101 = arith.extf %100 : vector<8x128xbf16> to vector<8x128xf32>
    %102 = arith.addf %101, %97 : vector<8x128xf32>
    %103 = math.tanh %102 : vector<8x128xf32>
    %104 = arith.truncf %103 : vector<8x128xf32> to vector<8x128xbf16>
    %105 = arith.index_cast %c7_i32 : i32 to index
    %c0_42 = arith.constant 0 : index
    %c0_43 = arith.constant 0 : index
    %106 = vector.load %arg4[%105, %c0_42, %c0_43] : memref<8x8x128xbf16, #tpu.memory_space<vmem>>, vector<1x8x128xbf16>
    %107 = vector.shape_cast %106 : vector<1x8x128xbf16> to vector<8x128xbf16>
    %108 = vector.shape_cast %104 : vector<8x128xbf16> to vector<1x8x128xbf16>
    tpu.vector_store %arg4[%105, %c0_42, %c0_43], %108 {strides = array<i32>} : memref<8x8x128xbf16, #tpu.memory_space<vmem>>, vector<1x8x128xbf16>,
    %c8_i32 = arith.constant 8 : i32
    %c0_44 = arith.constant 0 : index
    %c0_45 = arith.constant 0 : index
    %109 = vector.load %arg5[%c0_44, %c0_45] : memref<8x128xf32, #tpu.memory_space<vmem>>, vector<8x128xf32>
    tpu.vector_store %arg5[%c0_44, %c0_45], %103 {strides = array<i32>} : memref<8x128xf32, #tpu.memory_space<vmem>>, vector<8x128xf32>,
    return
  }
  func.func @transform_0(%arg0: i32, %arg1: i32) -> (i32, i32, i32) {
    %c0_i32 = arith.constant 0 : i32
    %c0_i32_0 = arith.constant 0 : i32
    return %arg1, %arg0, %c0_i32 : i32, i32, i32
  }
  func.func @transform_1(%arg0: i32, %arg1: i32) -> (i32, i32) {
    %c0_i32 = arith.constant 0 : i32
    %c0_i32_0 = arith.constant 0 : i32
    %c0_i32_1 = arith.constant 0 : i32
    return %c0_i32, %c0_i32_0 : i32, i32
  }
  func.func @transform_2(%arg0: i32, %arg1: i32) -> (i32, i32, i32) {
    %c0_i32 = arith.constant 0 : i32
    %c0_i32_0 = arith.constant 0 : i32
    return %arg1, %arg0, %c0_i32 : i32, i32, i32
  }
}

</mosaic_0001>

<llo_original>
// kernel: rnn_model_forward.1
$region0: #{rnn_model_forward.1}
  #allocation0 [shape = 'u32[]', space=smem, size = 0x4, offset = 0x4, fixed_abs, tag = 'smem constant byte address 0x4 - core index']
  #allocation1 [shape = 'u32[144,128]{1,0:T(1,128)}', space=vmem, size = 0x12000, scoped, tag = 'internal scratch']
  #allocation2 [shape = 'f32[8,128]{1,0:T(8,128)}', space=vmem, size = 0x1000, scoped, tag = 'scratch operand']
  %s0 = inlined_call_operand.vmem [shape: bf16[8,8,128], index: 0, kind: input, shape index: {}]
  %s1 = inlined_call_operand.vmem [shape: bf16[128,128], index: 1, kind: input, shape index: {}]
  %s2 = inlined_call_operand.vmem [shape: bf16[8,8,128], index: 2, kind: output, shape index: {}]
  %s3 = sld [smem:[#allocation0]]
  $region22: #{rnn_model_forward.1} parent=0
    _
  %s5 = ssub.s32 1, %s3
  %s6 = scalar_select 0, %s5, %s3
  // Predicated region
  $region2: #{rnn_model_forward.1} parent=0 // pred_check
    _
  $region3: #{rnn_model_forward.1} parent=0 // pred_check_branch
    %8 = sbr.rel (0) target = $region5
  $region4: #{rnn_model_forward.1} parent=0 // pred_region
    _
  $region5: #{rnn_model_forward.1} parent=0 // pred_fallthru
    _
  // Predicated region
  $region6: #{rnn_model_forward.1} parent=0 // pred_check
    _
  $region7: #{rnn_model_forward.1} parent=0 // pred_check_branch
    %10 = sbr.rel (0) target = $region9
  $region8: #{rnn_model_forward.1} parent=0 // pred_region
    _
  $region9: #{rnn_model_forward.1} parent=0 // pred_fallthru
    _
  %p12 = scmp.eq.s32.totalorder 0, 0
  // Predicated region
  $region10: #{rnn_model_forward.1} parent=0 // pred_check
    %p13 = pneg %p12
  $region11: #{rnn_model_forward.1} parent=0 // pred_check_branch
    %15 = sbr.rel (%p13) target = $region13
  $region12: #{rnn_model_forward.1} parent=0 // pred_region
    %16 = vst [vmem:[#allocation2] sm:$0xff] 0.0
  $region13: #{rnn_model_forward.1} parent=0 // pred_fallthru
    _
  %v17 = vld [vmem:[%s1] sm:$0xf]
  %v18 = vld [vmem:[%s1 + $0x4] sm:$0xf]
  %v19 = vld [vmem:[%s1 + $0x8] sm:$0xf]
  %v20 = vld [vmem:[%s1 + $0xc] sm:$0xf]
  %v21 = vld [vmem:[%s1 + $0x10] sm:$0xf]
  %v22 = vld [vmem:[%s1 + $0x14] sm:$0xf]
  %v23 = vld [vmem:[%s1 + $0x18] sm:$0xf]
  %v24 = vld [vmem:[%s1 + $0x1c] sm:$0xf]
  %v25 = vld [vmem:[%s1 + $0x20] sm:$0xf]
  %v26 = vld [vmem:[%s1 + $0x24] sm:$0xf]
  %v27 = vld [vmem:[%s1 + $0x28] sm:$0xf]
  %v28 = vld [vmem:[%s1 + $0x2c] sm:$0xf]
  %v29 = vld [vmem:[%s1 + $0x30] sm:$0xf]
  %v30 = vld [vmem:[%s1 + $0x34] sm:$0xf]
  %v31 = vld [vmem:[%s1 + $0x38] sm:$0xf]
  %v32 = vld [vmem:[%s1 + $0x3c] sm:$0xf]
  %v33 = vld [vmem:[#allocation2] sm:$0xff]
  %v34 = vpack.c.bf16 %v33, %v33
  %v51 = vunpack.c.l.b16 %v17
  %v52 = vunpack.c.l.b16 %v18
  %v53 = vunpack.c.l.b16 %v19
  %v54 = vunpack.c.l.b16 %v20
  %v55 = vunpack.c.l.b16 %v21
  %v56 = vunpack.c.l.b16 %v22
  %v57 = vunpack.c.l.b16 %v23
  %v58 = vunpack.c.l.b16 %v24
  %v59 = vunpack.c.l.b16 %v25
  %v60 = vunpack.c.l.b16 %v26
  %v61 = vunpack.c.l.b16 %v27
  %v62 = vunpack.c.l.b16 %v28
  %v63 = vunpack.c.l.b16 %v29
  %v64 = vunpack.c.l.b16 %v30
  %v65 = vunpack.c.l.b16 %v31
  %v66 = vunpack.c.l.b16 %v32
  %v67 = vpack.c.b16 %v52, %v51
  %v68 = vpack.c.b16 %v54, %v53
  %v69 = vpack.c.b16 %v56, %v55
  %v70 = vpack.c.b16 %v58, %v57
  %v71 = vpack.c.b16 %v60, %v59
  %v72 = vpack.c.b16 %v62, %v61
  %v73 = vpack.c.b16 %v64, %v63
  %v74 = vpack.c.b16 %v66, %v65
  %83 = vmatprep.subr.bf16.mxu0 0
  %84 = vmatpush1.bf16.msra.mxu0 %v67
  %85 = vmatprep.subr.bf16.mxu0 0
  %86 = vmatpush1.bf16.msra.mxu0 %v68
  %87 = vmatprep.subr.bf16.mxu0 0
  %88 = vmatpush1.bf16.msra.mxu0 %v69
  %89 = vmatprep.subr.bf16.mxu0 0
  %90 = vmatpush1.bf16.msra.mxu0 %v70
  %91 = vmatprep.subr.bf16.mxu0 0
  %92 = vmatpush1.bf16.msra.mxu0 %v71
  %93 = vmatprep.subr.bf16.mxu0 0
  %94 = vmatpush1.bf16.msra.mxu0 %v72
  %95 = vmatprep.subr.bf16.mxu0 0
  %96 = vmatpush1.bf16.msra.mxu0 %v73
  %97 = vmatprep.subr.bf16.mxu0 0
  %98 = vmatpush1.bf16.msra.mxu0 %v74
  %99 = vmatprep.subr.bf16.mxu0 0
  %100 = vmatpush1.bf16.msra.mxu0 0
  %101 = vmatprep.subr.bf16.mxu0 0
  %102 = vmatpush1.bf16.msra.mxu0 0
  %103 = vmatprep.subr.bf16.mxu0 0
  %104 = vmatpush1.bf16.msra.mxu0 0
  %105 = vmatprep.subr.bf16.mxu0 0
  %106 = vmatpush1.bf16.msra.mxu0 0
  %107 = vmatprep.subr.bf16.mxu0 0
  %108 = vmatpush1.bf16.msra.mxu0 0
  %109 = vmatprep.subr.bf16.mxu0 0
  %110 = vmatpush1.bf16.msra.mxu0 0
  %111 = vmatprep.subr.bf16.mxu0 0
  %112 = vmatpush1.bf16.msra.mxu0 0
  %113 = vmatprep.subr.bf16.mxu0 0
  %114 = vmatpush1.bf16.msra.mxu0 0
  %115 = vmatprep.mubr.bf16.mxu0 0
  %116 = vmatmul.mubr.bf16.gmra.mrb[0].mxu0 %v34
  %v117 = vpop.f32.mrb[0].mxu0
  %v118 = vadd.f32 0.0, %v117
  %v119 = vpop.f32.mrb[0].mxu0
  %v120 = vpop.f32.mrb[0].mxu0
  %v121 = vpop.f32.mrb[0].mxu0
  %122 = vdwg.mxu0
  %v123 = vld [vmem:[%s0] sm:$0xf]
  %v124 = vunpack.c.l.bf16 %v123
  %v125 = vadd.f32 %v124, %v118
  %v126 = vtanh.pop %v125
  %v127 = vpack.c.bf16 %v126, %v126
  %128 = vst [vmem:[%s2] sm:$0xf] %v127
  %129 = vmatprep.subr.bf16.mxu0 0
  %130 = vmatpush1.bf16.msra.mxu0 %v67
  %131 = vmatprep.subr.bf16.mxu0 0
  %132 = vmatpush1.bf16.msra.mxu0 %v68
  %133 = vmatprep.subr.bf16.mxu0 0
  %134 = vmatpush1.bf16.msra.mxu0 %v69
  %135 = vmatprep.subr.bf16.mxu0 0
  %136 = vmatpush1.bf16.msra.mxu0 %v70
  %137 = vmatprep.subr.bf16.mxu0 0
  %138 = vmatpush1.bf16.msra.mxu0 %v71
  %139 = vmatprep.subr.bf16.mxu0 0
  %140 = vmatpush1.bf16.msra.mxu0 %v72
  %141 = vmatprep.subr.bf16.mxu0 0
  %142 = vmatpush1.bf16.msra.mxu0 %v73
  %143 = vmatprep.subr.bf16.mxu0 0
  %144 = vmatpush1.bf16.msra.mxu0 %v74
  %145 = vmatprep.subr.bf16.mxu0 0
  %146 = vmatpush1.bf16.msra.mxu0 0
  %147 = vmatprep.subr.bf16.mxu0 0
  %148 = vmatpush1.bf16.msra.mxu0 0
  %149 = vmatprep.subr.bf16.mxu0 0
  %150 = vmatpush1.bf16.msra.mxu0 0
  %151 = vmatprep.subr.bf16.mxu0 0
  %152 = vmatpush1.bf16.msra.mxu0 0
  %153 = vmatprep.subr.bf16.mxu0 0
  %154 = vmatpush1.bf16.msra.mxu0 0
  %155 = vmatprep.subr.bf16.mxu0 0
  %156 = vmatpush1.bf16.msra.mxu0 0
  %157 = vmatprep.subr.bf16.mxu0 0
  %158 = vmatpush1.bf16.msra.mxu0 0
  %159 = vmatprep.subr.bf16.mxu0 0
  %160 = vmatpush1.bf16.msra.mxu0 0
  %161 = vmatprep.mubr.bf16.mxu0 0
  %162 = vmatmul.mubr.bf16.gmra.mrb[0].mxu0 %v127
  %v163 = vpop.f32.mrb[0].mxu0
  %v164 = vadd.f32 0.0, %v163
  %v165 = vpop.f32.mrb[0].mxu0
  %v166 = vpop.f32.mrb[0].mxu0
  %v167 = vpop.f32.mrb[0].mxu0
  %168 = vdwg.mxu0
  %s169 = scalar_lea.vmem %s0, 4
  %v170 = vld [vmem:[%s169] sm:$0xf]
  %v171 = vunpack.c.l.bf16 %v170
  %v172 = vadd.f32 %v171, %v164
  %v173 = vtanh.pop %v172
  %v174 = vpack.c.bf16 %v173, %v173
  %s175 = scalar_lea.vmem %s2, 4
  %176 = vst [vmem:[%s175] sm:$0xf] %v174
  %177 = vmatprep.subr.bf16.mxu0 0
  %178 = vmatpush1.bf16.msra.mxu0 %v67
  %179 = vmatprep.subr.bf16.mxu0 0
  %180 = vmatpush1.bf16.msra.mxu0 %v68
  %181 = vmatprep.subr.bf16.mxu0 0
  %182 = vmatpush1.bf16.msra.mxu0 %v69
  %183 = vmatprep.subr.bf16.mxu0 0
  %184 = vmatpush1.bf16.msra.mxu0 %v70
  %185 = vmatprep.subr.bf16.mxu0 0
  %186 = vmatpush1.bf16.msra.mxu0 %v71
  %187 = vmatprep.subr.bf16.mxu0 0
  %188 = vmatpush1.bf16.msra.mxu0 %v72
  %189 = vmatprep.subr.bf16.mxu0 0
  %190 = vmatpush1.bf16.msra.mxu0 %v73
  %191 = vmatprep.subr.bf16.mxu0 0
  %192 = vmatpush1.bf16.msra.mxu0 %v74
  %193 = vmatprep.subr.bf16.mxu0 0
  %194 = vmatpush1.bf16.msra.mxu0 0
  %195 = vmatprep.subr.bf16.mxu0 0
  %196 = vmatpush1.bf16.msra.mxu0 0
  %197 = vmatprep.subr.bf16.mxu0 0
  %198 = vmatpush1.bf16.msra.mxu0 0
  %199 = vmatprep.subr.bf16.mxu0 0
  %200 = vmatpush1.bf16.msra.mxu0 0
  %201 = vmatprep.subr.bf16.mxu0 0
  %202 = vmatpush1.bf16.msra.mxu0 0
  %203 = vmatprep.subr.bf16.mxu0 0
  %204 = vmatpush1.bf16.msra.mxu0 0
  %205 = vmatprep.subr.bf16.mxu0 0
  %206 = vmatpush1.bf16.msra.mxu0 0
  %207 = vmatprep.subr.bf16.mxu0 0
  %208 = vmatpush1.bf16.msra.mxu0 0
  %209 = vmatprep.mubr.bf16.mxu0 0
  %210 = vmatmul.mubr.bf16.gmra.mrb[0].mxu0 %v174
  %v211 = vpop.f32.mrb[0].mxu0
  %v212 = vadd.f32 0.0, %v211
  %v213 = vpop.f32.mrb[0].mxu0
  %v214 = vpop.f32.mrb[0].mxu0
  %v215 = vpop.f32.mrb[0].mxu0
  %216 = vdwg.mxu0
  %s217 = scalar_lea.vmem %s0, 8
  %v218 = vld [vmem:[%s217] sm:$0xf]
  %v219 = vunpack.c.l.bf16 %v218
  %v220 = vadd.f32 %v219, %v212
  %v221 = vtanh.pop %v220
  %v222 = vpack.c.bf16 %v221, %v221
  %s223 = scalar_lea.vmem %s2, 8
  %224 = vst [vmem:[%s223] sm:$0xf] %v222
  %225 = vmatprep.subr.bf16.mxu0 0
  %226 = vmatpush1.bf16.msra.mxu0 %v67
  %227 = vmatprep.subr.bf16.mxu0 0
  %228 = vmatpush1.bf16.msra.mxu0 %v68
  %229 = vmatprep.subr.bf16.mxu0 0
  %230 = vmatpush1.bf16.msra.mxu0 %v69
  %231 = vmatprep.subr.bf16.mxu0 0
  %232 = vmatpush1.bf16.msra.mxu0 %v70
  %233 = vmatprep.subr.bf16.mxu0 0
  %234 = vmatpush1.bf16.msra.mxu0 %v71
  %235 = vmatprep.subr.bf16.mxu0 0
  %236 = vmatpush1.bf16.msra.mxu0 %v72
  %237 = vmatprep.subr.bf16.mxu0 0
  %238 = vmatpush1.bf16.msra.mxu0 %v73
  %239 = vmatprep.subr.bf16.mxu0 0
  %240 = vmatpush1.bf16.msra.mxu0 %v74
  %241 = vmatprep.subr.bf16.mxu0 0
  %242 = vmatpush1.bf16.msra.mxu0 0
  %243 = vmatprep.subr.bf16.mxu0 0
  %244 = vmatpush1.bf16.msra.mxu0 0
  %245 = vmatprep.subr.bf16.mxu0 0
  %246 = vmatpush1.bf16.msra.mxu0 0
  %247 = vmatprep.subr.bf16.mxu0 0
  %248 = vmatpush1.bf16.msra.mxu0 0
  %249 = vmatprep.subr.bf16.mxu0 0
  %250 = vmatpush1.bf16.msra.mxu0 0
  %251 = vmatprep.subr.bf16.mxu0 0
  %252 = vmatpush1.bf16.msra.mxu0 0
  %253 = vmatprep.subr.bf16.mxu0 0
  %254 = vmatpush1.bf16.msra.mxu0 0
  %255 = vmatprep.subr.bf16.mxu0 0
  %256 = vmatpush1.bf16.msra.mxu0 0
  %257 = vmatprep.mubr.bf16.mxu0 0
  %258 = vmatmul.mubr.bf16.gmra.mrb[0].mxu0 %v222
  %v259 = vpop.f32.mrb[0].mxu0
  %v260 = vadd.f32 0.0, %v259
  %v261 = vpop.f32.mrb[0].mxu0
  %v262 = vpop.f32.mrb[0].mxu0
  %v263 = vpop.f32.mrb[0].mxu0
  %264 = vdwg.mxu0
  %s265 = scalar_lea.vmem %s0, 12
  %v266 = vld [vmem:[%s265] sm:$0xf]
  %v267 = vunpack.c.l.bf16 %v266
  %v268 = vadd.f32 %v267, %v260
  %v269 = vtanh.pop %v268
  %v270 = vpack.c.bf16 %v269, %v269
  %s271 = scalar_lea.vmem %s2, 12
  %272 = vst [vmem:[%s271] sm:$0xf] %v270
  %273 = vmatprep.subr.bf16.mxu0 0
  %274 = vmatpush1.bf16.msra.mxu0 %v67
  %275 = vmatprep.subr.bf16.mxu0 0
  %276 = vmatpush1.bf16.msra.mxu0 %v68
  %277 = vmatprep.subr.bf16.mxu0 0
  %278 = vmatpush1.bf16.msra.mxu0 %v69
  %279 = vmatprep.subr.bf16.mxu0 0
  %280 = vmatpush1.bf16.msra.mxu0 %v70
  %281 = vmatprep.subr.bf16.mxu0 0
  %282 = vmatpush1.bf16.msra.mxu0 %v71
  %283 = vmatprep.subr.bf16.mxu0 0
  %284 = vmatpush1.bf16.msra.mxu0 %v72
  %285 = vmatprep.subr.bf16.mxu0 0
  %286 = vmatpush1.bf16.msra.mxu0 %v73
  %287 = vmatprep.subr.bf16.mxu0 0
  %288 = vmatpush1.bf16.msra.mxu0 %v74
  %289 = vmatprep.subr.bf16.mxu0 0
  %290 = vmatpush1.bf16.msra.mxu0 0
  %291 = vmatprep.subr.bf16.mxu0 0
  %292 = vmatpush1.bf16.msra.mxu0 0
  %293 = vmatprep.subr.bf16.mxu0 0
  %294 = vmatpush1.bf16.msra.mxu0 0
  %295 = vmatprep.subr.bf16.mxu0 0
  %296 = vmatpush1.bf16.msra.mxu0 0
  %297 = vmatprep.subr.bf16.mxu0 0
  %298 = vmatpush1.bf16.msra.mxu0 0
  %299 = vmatprep.subr.bf16.mxu0 0
  %300 = vmatpush1.bf16.msra.mxu0 0
  %301 = vmatprep.subr.bf16.mxu0 0
  %302 = vmatpush1.bf16.msra.mxu0 0
  %303 = vmatprep.subr.bf16.mxu0 0
  %304 = vmatpush1.bf16.msra.mxu0 0
  %305 = vmatprep.mubr.bf16.mxu0 0
  %306 = vmatmul.mubr.bf16.gmra.mrb[0].mxu0 %v270
  %v307 = vpop.f32.mrb[0].mxu0
  %v308 = vadd.f32 0.0, %v307
  %v309 = vpop.f32.mrb[0].mxu0
  %v310 = vpop.f32.mrb[0].mxu0
  %v311 = vpop.f32.mrb[0].mxu0
  %312 = vdwg.mxu0
  %s313 = scalar_lea.vmem %s0, 16
  %v314 = vld [vmem:[%s313] sm:$0xf]
  %v315 = vunpack.c.l.bf16 %v314
  %v316 = vadd.f32 %v315, %v308
  %v317 = vtanh.pop %v316
  %v318 = vpack.c.bf16 %v317, %v317
  %s319 = scalar_lea.vmem %s2, 16
  %320 = vst [vmem:[%s319] sm:$0xf] %v318
  %321 = vmatprep.subr.bf16.mxu0 0
  %322 = vmatpush1.bf16.msra.mxu0 %v67
  %323 = vmatprep.subr.bf16.mxu0 0
  %324 = vmatpush1.bf16.msra.mxu0 %v68
  %325 = vmatprep.subr.bf16.mxu0 0
  %326 = vmatpush1.bf16.msra.mxu0 %v69
  %327 = vmatprep.subr.bf16.mxu0 0
  %328 = vmatpush1.bf16.msra.mxu0 %v70
  %329 = vmatprep.subr.bf16.mxu0 0
  %330 = vmatpush1.bf16.msra.mxu0 %v71
  %331 = vmatprep.subr.bf16.mxu0 0
  %332 = vmatpush1.bf16.msra.mxu0 %v72
  %333 = vmatprep.subr.bf16.mxu0 0
  %334 = vmatpush1.bf16.msra.mxu0 %v73
  %335 = vmatprep.subr.bf16.mxu0 0
  %336 = vmatpush1.bf16.msra.mxu0 %v74
  %337 = vmatprep.subr.bf16.mxu0 0
  %338 = vmatpush1.bf16.msra.mxu0 0
  %339 = vmatprep.subr.bf16.mxu0 0
  %340 = vmatpush1.bf16.msra.mxu0 0
  %341 = vmatprep.subr.bf16.mxu0 0
  %342 = vmatpush1.bf16.msra.mxu0 0
  %343 = vmatprep.subr.bf16.mxu0 0
  %344 = vmatpush1.bf16.msra.mxu0 0
  %345 = vmatprep.subr.bf16.mxu0 0
  %346 = vmatpush1.bf16.msra.mxu0 0
  %347 = vmatprep.subr.bf16.mxu0 0
  %348 = vmatpush1.bf16.msra.mxu0 0
  %349 = vmatprep.subr.bf16.mxu0 0
  %350 = vmatpush1.bf16.msra.mxu0 0
  %351 = vmatprep.subr.bf16.mxu0 0
  %352 = vmatpush1.bf16.msra.mxu0 0
  %353 = vmatprep.mubr.bf16.mxu0 0
  %354 = vmatmul.mubr.bf16.gmra.mrb[0].mxu0 %v318
  %v355 = vpop.f32.mrb[0].mxu0
  %v356 = vadd.f32 0.0, %v355
  %v357 = vpop.f32.mrb[0].mxu0
  %v358 = vpop.f32.mrb[0].mxu0
  %v359 = vpop.f32.mrb[0].mxu0
  %360 = vdwg.mxu0
  %s361 = scalar_lea.vmem %s0, 20
  %v362 = vld [vmem:[%s361] sm:$0xf]
  %v363 = vunpack.c.l.bf16 %v362
  %v364 = vadd.f32 %v363, %v356
  %v365 = vtanh.pop %v364
  %v366 = vpack.c.bf16 %v365, %v365
  %s367 = scalar_lea.vmem %s2, 20
  %368 = vst [vmem:[%s367] sm:$0xf] %v366
  %369 = vmatprep.subr.bf16.mxu0 0
  %370 = vmatpush1.bf16.msra.mxu0 %v67
  %371 = vmatprep.subr.bf16.mxu0 0
  %372 = vmatpush1.bf16.msra.mxu0 %v68
  %373 = vmatprep.subr.bf16.mxu0 0
  %374 = vmatpush1.bf16.msra.mxu0 %v69
  %375 = vmatprep.subr.bf16.mxu0 0
  %376 = vmatpush1.bf16.msra.mxu0 %v70
  %377 = vmatprep.subr.bf16.mxu0 0
  %378 = vmatpush1.bf16.msra.mxu0 %v71
  %379 = vmatprep.subr.bf16.mxu0 0
  %380 = vmatpush1.bf16.msra.mxu0 %v72
  %381 = vmatprep.subr.bf16.mxu0 0
  %382 = vmatpush1.bf16.msra.mxu0 %v73
  %383 = vmatprep.subr.bf16.mxu0 0
  %384 = vmatpush1.bf16.msra.mxu0 %v74
  %385 = vmatprep.subr.bf16.mxu0 0
  %386 = vmatpush1.bf16.msra.mxu0 0
  %387 = vmatprep.subr.bf16.mxu0 0
  %388 = vmatpush1.bf16.msra.mxu0 0
  %389 = vmatprep.subr.bf16.mxu0 0
  %390 = vmatpush1.bf16.msra.mxu0 0
  %391 = vmatprep.subr.bf16.mxu0 0
  %392 = vmatpush1.bf16.msra.mxu0 0
  %393 = vmatprep.subr.bf16.mxu0 0
  %394 = vmatpush1.bf16.msra.mxu0 0
  %395 = vmatprep.subr.bf16.mxu0 0
  %396 = vmatpush1.bf16.msra.mxu0 0
  %397 = vmatprep.subr.bf16.mxu0 0
  %398 = vmatpush1.bf16.msra.mxu0 0
  %399 = vmatprep.subr.bf16.mxu0 0
  %400 = vmatpush1.bf16.msra.mxu0 0
  %401 = vmatprep.mubr.bf16.mxu0 0
  %402 = vmatmul.mubr.bf16.gmra.mrb[0].mxu0 %v366
  %v403 = vpop.f32.mrb[0].mxu0
  %v404 = vadd.f32 0.0, %v403
  %v405 = vpop.f32.mrb[0].mxu0
  %v406 = vpop.f32.mrb[0].mxu0
  %v407 = vpop.f32.mrb[0].mxu0
  %408 = vdwg.mxu0
  %s409 = scalar_lea.vmem %s0, 24
  %v410 = vld [vmem:[%s409] sm:$0xf]
  %v411 = vunpack.c.l.bf16 %v410
  %v412 = vadd.f32 %v411, %v404
  %v413 = vtanh.pop %v412
  %v414 = vpack.c.bf16 %v413, %v413
  %s415 = scalar_lea.vmem %s2, 24
  %416 = vst [vmem:[%s415] sm:$0xf] %v414
  %417 = vmatprep.subr.bf16.mxu0 0
  %418 = vmatpush1.bf16.msra.mxu0 %v67
  %419 = vmatprep.subr.bf16.mxu0 0
  %420 = vmatpush1.bf16.msra.mxu0 %v68
  %421 = vmatprep.subr.bf16.mxu0 0
  %422 = vmatpush1.bf16.msra.mxu0 %v69
  %423 = vmatprep.subr.bf16.mxu0 0
  %424 = vmatpush1.bf16.msra.mxu0 %v70
  %425 = vmatprep.subr.bf16.mxu0 0
  %426 = vmatpush1.bf16.msra.mxu0 %v71
  %427 = vmatprep.subr.bf16.mxu0 0
  %428 = vmatpush1.bf16.msra.mxu0 %v72
  %429 = vmatprep.subr.bf16.mxu0 0
  %430 = vmatpush1.bf16.msra.mxu0 %v73
  %431 = vmatprep.subr.bf16.mxu0 0
  %432 = vmatpush1.bf16.msra.mxu0 %v74
  %433 = vmatprep.subr.bf16.mxu0 0
  %434 = vmatpush1.bf16.msra.mxu0 0
  %435 = vmatprep.subr.bf16.mxu0 0
  %436 = vmatpush1.bf16.msra.mxu0 0
  %437 = vmatprep.subr.bf16.mxu0 0
  %438 = vmatpush1.bf16.msra.mxu0 0
  %439 = vmatprep.subr.bf16.mxu0 0
  %440 = vmatpush1.bf16.msra.mxu0 0
  %441 = vmatprep.subr.bf16.mxu0 0
  %442 = vmatpush1.bf16.msra.mxu0 0
  %443 = vmatprep.subr.bf16.mxu0 0
  %444 = vmatpush1.bf16.msra.mxu0 0
  %445 = vmatprep.subr.bf16.mxu0 0
  %446 = vmatpush1.bf16.msra.mxu0 0
  %447 = vmatprep.subr.bf16.mxu0 0
  %448 = vmatpush1.bf16.msra.mxu0 0
  %449 = vmatprep.mubr.bf16.mxu0 0
  %450 = vmatmul.mubr.bf16.gmra.mrb[0].mxu0 %v414
  %v451 = vpop.f32.mrb[0].mxu0
  %v452 = vadd.f32 0.0, %v451
  %v453 = vpop.f32.mrb[0].mxu0
  %v454 = vpop.f32.mrb[0].mxu0
  %v455 = vpop.f32.mrb[0].mxu0
  %456 = vdwg.mxu0
  %s457 = scalar_lea.vmem %s0, 28
  %v458 = vld [vmem:[%s457] sm:$0xf]
  %v459 = vunpack.c.l.bf16 %v458
  %v460 = vadd.f32 %v459, %v452
  %v461 = vtanh.pop %v460
  %v462 = vpack.c.bf16 %v461, %v461
  %s463 = scalar_lea.vmem %s2, 28
  %464 = vst [vmem:[%s463] sm:$0xf] %v462
  %465 = vst [vmem:[#allocation2] sm:$0xff] %v461
  // Predicated region
  $region14: #{rnn_model_forward.1} parent=0 // pred_check
    _
  $region15: #{rnn_model_forward.1} parent=0 // pred_check_branch
    %467 = sbr.rel (0) target = $region17
  $region16: #{rnn_model_forward.1} parent=0 // pred_region
    _
  $region17: #{rnn_model_forward.1} parent=0 // pred_fallthru
    _
  // Predicated region
  $region18: #{rnn_model_forward.1} parent=0 // pred_check
    _
  $region19: #{rnn_model_forward.1} parent=0 // pred_check_branch
    %469 = sbr.rel (0) target = $region21
  $region20: #{rnn_model_forward.1} parent=0 // pred_region
    _
  $region21: #{rnn_model_forward.1} parent=0 // pred_fallthru
    _

</llo_original>
